<compile_context>
chip_gen: v5e
topology: v5e:2x2
jax: 0.10.0
libtpu: 0.0.40
codegen_flags: <defaults>
</compile_context>

<pallas_src>
import jax
import jax.numpy as jnp
from jax.experimental import pallas as pl
from jax.experimental.pallas import tpu as pltpu


# ----------------------------- fused Pallas kernel ---------------------------

def _res_encoder_kernel(x_ref, w1_ref, w2_ref, b1_ref, b2_ref, o_ref):
    """`batch_block` images per step, fully fused in VMEM.

      x_ref:  (Nb, H, W*Cin)            input images, wide layout
      w1_ref: (3*W*Cin, 2*W*Cout)       [ky-stacked band1 | residual 1x1 block-diag]
      w2_ref: (3*W*Cout, W*Cout)        ky-stacked band2
      b1_ref: (1, 2*W*Cout)             [bn1-folded bias | conv1x1 bias], tiled over W
      b2_ref: (1, W*Cout)               bn2-folded bias, tiled over W
      o_ref:  (Nb, H, W*Cout)           output, lane-dense (multiple of 128)
    """
    nb, h, wci = x_ref.shape
    wco = o_ref.shape[2]
    m = nb * h

    x = x_ref[...].reshape(m, wci)

    # Image-boundary row masks (only needed when several images share the
    # flattened M axis).
    if nb > 1:
        row = jax.lax.broadcasted_iota(jnp.int32, (m, 1), 0)
        not_first = (row % h) != 0
        not_last = (row % h) != (h - 1)

    def k_stack(a):
        # Zero-padded row shifts (H padding of the 3x3 conv), then K-concat so
        # the three ky taps become ONE matmul instead of three.
        z = jnp.zeros((1, a.shape[1]), a.dtype)
        a_dn = jnp.concatenate([z, a[:-1]], axis=0)     # row r <- a[r-1]
        a_up = jnp.concatenate([a[1:], z], axis=0)      # row r <- a[r+1]
        if nb > 1:
            a_dn = jnp.where(not_first, a_dn, 0.0)
            a_up = jnp.where(not_last, a_up, 0.0)
        return jnp.concatenate([a_dn, a, a_up], axis=-1)   # (M, 3*width)

    # Stage 1 + residual: one (M, 3*WCi) x (3*WCi, 2*WCo) matmul.
    y1 = jnp.dot(k_stack(x), w1_ref[...], preferred_element_type=jnp.float32)
    y1 = y1 + b1_ref[...]
    a1 = jnp.maximum(y1[:, :wco], 0.0)                  # relu(bn1(conv1(x)))
    res = y1[:, wco:]                                   # conv1x1(x) + b3

    # Stage 2: one (M, 3*WCo) x (3*WCo, WCo) matmul.
    y2 = jnp.dot(k_stack(a1), w2_ref[...], preferred_element_type=jnp.float32)
    a2 = jnp.maximum(y2 + b2_ref[...], 0.0)             # relu(bn2(conv2(a1)))

    o_ref[...] = jnp.maximum(a2 + res, 0.0).reshape(nb, h, wco)


# ------------------- one-time (hoisted) weight preparation --------------------

def _fold_bn(conv_b, gamma, beta, mean, var, eps=1e-5):
    """Eval-mode BN folded into a per-channel (scale, bias)."""
    scale = gamma / jnp.sqrt(var + eps)                 # (Cout,)
    bias = beta + (conv_b - mean) * scale               # (Cout,)
    return scale, bias


def _band_weights(w_hwio, W):
    """(3,3,Cin,Cout) HWIO conv weights -> (3, W*Cin, W*Cout) banded matrices.

    Band[ky][w_in*Cin+ci, w*Cout+co] = w[ky, w_in-w+1, ci, co] when the kx tap
    is in range, else 0 -- encodes both the kx taps and zero-padding along W.
    """
    _, _, Cin, Cout = w_hwio.shape
    w_in = jnp.arange(W)[:, None]                       # (W, 1)
    w_out = jnp.arange(W)[None, :]                      # (1, W)
    kx = w_in - w_out + 1                               # (W, W)
    valid = ((kx >= 0) & (kx < 3)).astype(w_hwio.dtype)
    kx = jnp.clip(kx, 0, 2)
    band = w_hwio[:, kx, :, :]                          # (3, W_in, W_out, Cin, Cout)
    band = band * valid[None, :, :, None, None]
    band = jnp.transpose(band, (0, 1, 3, 2, 4))         # (3, W_in, Cin, W_out, Cout)
    return band.reshape(3, W * Cin, W * Cout)


def _block_diag_1x1(w_io, W):
    """(Cin,Cout) 1x1 conv weights -> (W*Cin, W*Cout) block-diagonal matrix."""
    Cin, Cout = w_io.shape
    eye = jnp.eye(W, dtype=w_io.dtype)
    wd = eye[:, None, :, None] * w_io[None, :, None, :]  # (W, Cin, W, Cout)
    return wd.reshape(W * Cin, W * Cout)


def prepare_params(params, W):
    """One-time prep, hoisted out of the per-call hot path:
    fold eval-mode BN, build banded 3x3 matrices, stack the ky taps along K,
    and fuse the 1x1 residual into the conv1 output columns."""
    assert params["w1"].shape[:2] == (3, 3) and params["w2"].shape[:2] == (3, 3), \
        "banded construction assumes 3x3 convs with stride=1, padding=1"
    Cin, Cout = params["w1"].shape[2], params["w1"].shape[3]
    WCi, WCo = W * Cin, W * Cout

    s1, b1 = _fold_bn(params["b1"], params["g1"], params["be1"],
                      params["m1"], params["v1"])
    s2, b2 = _fold_bn(params["b2"], params["g2"], params["be2"],
                      params["m2"], params["v2"])

    band1 = _band_weights(params["w1"] * s1, W).reshape(3 * WCi, WCo)
    band2 = _band_weights(params["w2"] * s2, W).reshape(3 * WCo, WCo)
    w3bd = _block_diag_1x1(params["w3"], W)              # (WCi, WCo)

    # Residual uses the un-shifted (middle) K chunk of the stacked LHS.
    zeros = jnp.zeros((WCi, WCo), jnp.float32)
    res_cols = jnp.concatenate([zeros, w3bd, zeros], axis=0)   # (3*WCi, WCo)
    w1_fused = jnp.concatenate([band1, res_cols], axis=1)      # (3*WCi, 2*WCo)

    b1_fused = jnp.concatenate([jnp.tile(b1, W),
                                jnp.tile(params["b3"], W)])[None, :]   # (1, 2*WCo)
    b2_tiled = jnp.tile(b2, W)[None, :]                                # (1, WCo)

    # Note: cast these to bf16 for v6e/v7x MXU throughput once tolerance allows.
    return {"w1": w1_fused.astype(jnp.float32),
            "w2": band2.astype(jnp.float32),
            "b1": b1_fused.astype(jnp.float32),
            "b2": b2_tiled.astype(jnp.float32)}


# --------------------------------- forward ------------------------------------

def res_encoder(x_nchw, prep, *, batch_block=None):
    N, Cin, H, W = x_nchw.shape
    WCi = W * Cin
    WCo2 = prep["w1"].shape[1]
    WCo = WCo2 // 2
    Cout = WCo // W

    if batch_block is None:
        # Batch-block to amortize the ~0.35us/step grid overhead, but keep
        # >= 2 grid steps so both v7x TensorCores stay busy.
        batch_block = N // 2 if (N >= 2 and N % 2 == 0) else 1
    assert N % batch_block == 0
    steps = N // batch_block

    # NCHW -> (N, H, W*Cin): image rows in sublanes, (w, c) packed along lanes.
    x_wide = jnp.transpose(x_nchw, (0, 2, 3, 1)).astype(jnp.float32)
    x_wide = x_wide.reshape(N, H, WCi)

    out_wide = pl.pallas_call(
        _res_encoder_kernel,
        out_shape=jax.ShapeDtypeStruct((N, H, WCo), jnp.float32),
        grid_spec=pltpu.PrefetchScalarGridSpec(
            num_scalar_prefetch=0,
            grid=(steps,),
            in_specs=[
                pl.BlockSpec((batch_block, H, WCi), lambda n: (n, 0, 0)),
                # constant-index weight blocks: fetched once, stay VMEM-resident
                pl.BlockSpec((3 * WCi, WCo2), lambda n: (0, 0)),
                pl.BlockSpec((3 * WCo, WCo), lambda n: (0, 0)),
                pl.BlockSpec((1, WCo2), lambda n: (0, 0)),
                pl.BlockSpec((1, WCo), lambda n: (0, 0)),
            ],
            out_specs=pl.BlockSpec((batch_block, H, WCo), lambda n: (n, 0, 0)),
        ),
        compiler_params=pltpu.CompilerParams(
            dimension_semantics=("parallel",)),     # batch axis -> 2 TCs on v7x
    )(x_wide, prep["w1"], prep["w2"], prep["b1"], prep["b2"])

    # (N, H, W*Cout) -> (N, H, W, Cout) -> NCHW
    return jnp.transpose(out_wide.reshape(N, H, W, Cout), (0, 3, 1, 2))


# ------------------------------ Parameters ------------------------------------

def make_params(key, in_channels, out_channels):
    ks = jax.random.split(key, 16)
    p = {}
    # conv weights stored in HWIO; 1x1 conv as (Cin, Cout).
    p["w1"] = 0.1 * jax.random.normal(ks[0], (3, 3, in_channels, out_channels), jnp.float32)
    p["b1"] = 0.1 * jax.random.normal(ks[1], (out_channels,), jnp.float32)
    p["w2"] = 0.1 * jax.random.normal(ks[2], (3, 3, out_channels, out_channels), jnp.float32)
    p["b2"] = 0.1 * jax.random.normal(ks[3], (out_channels,), jnp.float32)
    p["w3"] = 0.1 * jax.random.normal(ks[4], (in_channels, out_channels), jnp.float32)
    p["b3"] = 0.1 * jax.random.normal(ks[5], (out_channels,), jnp.float32)
    # BN (eval-mode) params: gamma, beta, running_mean, running_var (>0).
    p["g1"] = 1.0 + 0.1 * jax.random.normal(ks[6], (out_channels,), jnp.float32)
    p["be1"] = 0.1 * jax.random.normal(ks[7], (out_channels,), jnp.float32)
    p["m1"] = 0.1 * jax.random.normal(ks[8], (out_channels,), jnp.float32)
    p["v1"] = jnp.abs(jax.random.normal(ks[9], (out_channels,), jnp.float32)) + 0.5
    p["g2"] = 1.0 + 0.1 * jax.random.normal(ks[10], (out_channels,), jnp.float32)
    p["be2"] = 0.1 * jax.random.normal(ks[11], (out_channels,), jnp.float32)
    p["m2"] = 0.1 * jax.random.normal(ks[12], (out_channels,), jnp.float32)
    p["v2"] = jnp.abs(jax.random.normal(ks[13], (out_channels,), jnp.float32)) + 0.5
    return p


# ------------------------------ Reference ------------------------------------

def _ref_forward(x_nchw, p, eps=1e-5):
    x = jnp.transpose(x_nchw, (0, 2, 3, 1)).astype(jnp.float32)

    def conv(inp, w_hwio, b, pad):
        y = jax.lax.conv_general_dilated(
            inp, w_hwio, window_strides=(1, 1), padding=pad,
            dimension_numbers=("NHWC", "HWIO", "NHWC"))
        return y + b

    def bn(y, g, be, m, v):
        return (y - m) / jnp.sqrt(v + eps) * g + be

    relu = lambda t: jnp.maximum(t, 0.0)
    out = relu(bn(conv(x, p["w1"], p["b1"], [(1, 1), (1, 1)]),
                  p["g1"], p["be1"], p["m1"], p["v1"]))
    out = relu(bn(conv(out, p["w2"], p["b2"], [(1, 1), (1, 1)]),
                  p["g2"], p["be2"], p["m2"], p["v2"]))
    res = conv(x, p["w3"][None, None, :, :], p["b3"], [(0, 0), (0, 0)])
    out = relu(out + res)
    return jnp.transpose(out, (0, 3, 1, 2))


# --------------------------------- Main ---------------------------------------

if __name__ == "__main__":
    N, Cin, Cout, H, W = 2, 4, 8, 16, 16
    key = jax.random.PRNGKey(0)
    kx, kp = jax.random.split(key)
    x = jax.random.normal(kx, (N, Cin, H, W), jnp.float32)   # NCHW, like PyTorch
    params = make_params(kp, Cin, Cout)

    prep = prepare_params(params, W)          # one-time, outside the hot path
    fwd = jax.jit(res_encoder)
    out = jax.block_until_ready(fwd(x, prep))
    ref = jax.block_until_ready(_ref_forward(x, params))

    assert out.shape == (N, Cout, H, W), out.shape
    assert jnp.allclose(out, ref, rtol=1e-4, atol=1e-4), \
        float(jnp.max(jnp.abs(out - ref)))
    print("KERNEL_OK")
</pallas_src>

<mosaic_0001>
module attributes {stable_mosaic.version = 11 : i64} {
  func.func @_res_encoder_kernel(%arg0: i32, %arg1: memref<1x16x64xf32, #tpu.memory_space<vmem>>, %arg2: memref<192x256xf32, #tpu.memory_space<vmem>>, %arg3: memref<384x128xf32, #tpu.memory_space<vmem>>, %arg4: memref<1x256xf32, #tpu.memory_space<vmem>>, %arg5: memref<1x128xf32, #tpu.memory_space<vmem>>, %arg6: memref<1x16x128xf32, #tpu.memory_space<vmem>>) attributes {dimension_semantics = [#tpu.dimension_semantics<parallel>], iteration_bounds = array<i64: 2>, scalar_prefetch = 0 : i64, scratch_operands = 0 : i64, tpu.core_type = #tpu.core_type<tc>, window_params = [{transform_indices = @transform_0, window_bounds = array<i64: 1, 16, 64>}, {pipeline_mode = #tpu.pipeline_mode<synchronous>, transform_indices = @transform_1, window_bounds = array<i64: 192, 256>}, {pipeline_mode = #tpu.pipeline_mode<synchronous>, transform_indices = @transform_2, window_bounds = array<i64: 384, 128>}, {pipeline_mode = #tpu.pipeline_mode<synchronous>, transform_indices = @transform_3, window_bounds = array<i64: 1, 256>}, {pipeline_mode = #tpu.pipeline_mode<synchronous>, transform_indices = @transform_4, window_bounds = array<i64: 1, 128>}, {transform_indices = @transform_5, window_bounds = array<i64: 1, 16, 128>}]} {
    %c0 = arith.constant 0 : index
    %c0_0 = arith.constant 0 : index
    %c0_1 = arith.constant 0 : index
    %0 = vector.load %arg1[%c0, %c0_0, %c0_1] : memref<1x16x64xf32, #tpu.memory_space<vmem>>, vector<1x16x64xf32>
    %1 = vector.shape_cast %0 : vector<1x16x64xf32> to vector<16x64xf32>
    %cst = arith.constant 0.000000e+00 : f32
    %2 = vector.broadcast %cst : f32 to vector<1x64xf32>
    %3 = vector.extract_strided_slice %1 {offsets = [0, 0], sizes = [15, 64], strides = [1, 1]} : vector<16x64xf32> to vector<15x64xf32>
    %4 = tpu.concatenate %2, %3 in 0 : vector<1x64xf32>, vector<15x64xf32> -> vector<16x64xf32>
    %5 = vector.extract_strided_slice %1 {offsets = [1, 0], sizes = [15, 64], strides = [1, 1]} : vector<16x64xf32> to vector<15x64xf32>
    %6 = tpu.concatenate %5, %2 in 0 : vector<15x64xf32>, vector<1x64xf32> -> vector<16x64xf32>
    %7 = tpu.concatenate %4, %1, %6 in 1 : vector<16x64xf32>, vector<16x64xf32>, vector<16x64xf32> -> vector<16x192xf32>
    %c0_2 = arith.constant 0 : index
    %c0_3 = arith.constant 0 : index
    %8 = vector.load %arg2[%c0_2, %c0_3] : memref<192x256xf32, #tpu.memory_space<vmem>>, vector<192x256xf32>
    %cst_4 = arith.constant dense<0.000000e+00> : vector<16x256xf32>
    %9 = tpu.matmul %7, %8, %cst_4 {dimension_numbers = #tpu.dot_dimension_numbers<[1], [0], [0], [1], [0, 0, 1, 1], [], []>} : vector<16x192xf32>, vector<192x256xf32>, vector<16x256xf32> -> vector<16x256xf32>
    %c0_5 = arith.constant 0 : index
    %c0_6 = arith.constant 0 : index
    %10 = vector.load %arg4[%c0_5, %c0_6] : memref<1x256xf32, #tpu.memory_space<vmem>>, vector<1x256xf32>
    %11 = vector.broadcast %10 : vector<1x256xf32> to vector<16x256xf32>
    %12 = arith.addf %9, %11 : vector<16x256xf32>
    %13 = vector.extract_strided_slice %12 {offsets = [0, 0], sizes = [16, 128], strides = [1, 1]} : vector<16x256xf32> to vector<16x128xf32>
    %cst_7 = arith.constant 0.000000e+00 : f32
    %14 = vector.broadcast %cst_7 : f32 to vector<16x128xf32>
    %15 = arith.maximumf %13, %14 : vector<16x128xf32>
    %16 = vector.extract_strided_slice %12 {offsets = [0, 128], sizes = [16, 128], strides = [1, 1]} : vector<16x256xf32> to vector<16x128xf32>
    %cst_8 = arith.constant 0.000000e+00 : f32
    %17 = vector.broadcast %cst_8 : f32 to vector<1x128xf32>
    %18 = vector.extract_strided_slice %15 {offsets = [0, 0], sizes = [15, 128], strides = [1, 1]} : vector<16x128xf32> to vector<15x128xf32>
    %19 = tpu.concatenate %17, %18 in 0 : vector<1x128xf32>, vector<15x128xf32> -> vector<16x128xf32>
    %20 = vector.extract_strided_slice %15 {offsets = [1, 0], sizes = [15, 128], strides = [1, 1]} : vector<16x128xf32> to vector<15x128xf32>
    %21 = tpu.concatenate %20, %17 in 0 : vector<15x128xf32>, vector<1x128xf32> -> vector<16x128xf32>
    %22 = tpu.concatenate %19, %15, %21 in 1 : vector<16x128xf32>, vector<16x128xf32>, vector<16x128xf32> -> vector<16x384xf32>
    %c0_9 = arith.constant 0 : index
    %c0_10 = arith.constant 0 : index
    %23 = vector.load %arg3[%c0_9, %c0_10] : memref<384x128xf32, #tpu.memory_space<vmem>>, vector<384x128xf32>
    %cst_11 = arith.constant dense<0.000000e+00> : vector<16x128xf32>
    %24 = tpu.matmul %22, %23, %cst_11 {dimension_numbers = #tpu.dot_dimension_numbers<[1], [0], [0], [1], [0, 0, 1, 1], [], []>} : vector<16x384xf32>, vector<384x128xf32>, vector<16x128xf32> -> vector<16x128xf32>
    %c0_12 = arith.constant 0 : index
    %c0_13 = arith.constant 0 : index
    %25 = vector.load %arg5[%c0_12, %c0_13] : memref<1x128xf32, #tpu.memory_space<vmem>>, vector<1x128xf32>
    %26 = vector.broadcast %25 : vector<1x128xf32> to vector<16x128xf32>
    %27 = arith.addf %24, %26 : vector<16x128xf32>
    %cst_14 = arith.constant 0.000000e+00 : f32
    %28 = vector.broadcast %cst_14 : f32 to vector<16x128xf32>
    %29 = arith.maximumf %27, %28 : vector<16x128xf32>
    %30 = arith.addf %29, %16 : vector<16x128xf32>
    %cst_15 = arith.constant 0.000000e+00 : f32
    %31 = vector.broadcast %cst_15 : f32 to vector<16x128xf32>
    %32 = arith.maximumf %30, %31 : vector<16x128xf32>
    %33 = vector.shape_cast %32 : vector<16x128xf32> to vector<1x16x128xf32>
    %c0_16 = arith.constant 0 : index
    %c0_17 = arith.constant 0 : index
    %c0_18 = arith.constant 0 : index
    %34 = vector.load %arg6[%c0_16, %c0_17, %c0_18] : memref<1x16x128xf32, #tpu.memory_space<vmem>>, vector<1x16x128xf32>
    tpu.vector_store %arg6[%c0_16, %c0_17, %c0_18], %33 {strides = array<i32>} : memref<1x16x128xf32, #tpu.memory_space<vmem>>, vector<1x16x128xf32>,
    return
  }
  func.func @transform_0(%arg0: i32) -> (i32, i32, i32) {
    %c0_i32 = arith.constant 0 : i32
    %c0_i32_0 = arith.constant 0 : i32
    %c0_i32_1 = arith.constant 0 : i32
    return %arg0, %c0_i32, %c0_i32_0 : i32, i32, i32
  }
  func.func @transform_1(%arg0: i32) -> (i32, i32) {
    %c0_i32 = arith.constant 0 : i32
    %c0_i32_0 = arith.constant 0 : i32
    %c0_i32_1 = arith.constant 0 : i32
    return %c0_i32, %c0_i32_0 : i32, i32
  }
  func.func @transform_2(%arg0: i32) -> (i32, i32) {
    %c0_i32 = arith.constant 0 : i32
    %c0_i32_0 = arith.constant 0 : i32
    %c0_i32_1 = arith.constant 0 : i32
    return %c0_i32, %c0_i32_0 : i32, i32
  }
  func.func @transform_3(%arg0: i32) -> (i32, i32) {
    %c0_i32 = arith.constant 0 : i32
    %c0_i32_0 = arith.constant 0 : i32
    %c0_i32_1 = arith.constant 0 : i32
    return %c0_i32, %c0_i32_0 : i32, i32
  }
  func.func @transform_4(%arg0: i32) -> (i32, i32) {
    %c0_i32 = arith.constant 0 : i32
    %c0_i32_0 = arith.constant 0 : i32
    %c0_i32_1 = arith.constant 0 : i32
    return %c0_i32, %c0_i32_0 : i32, i32
  }
  func.func @transform_5(%arg0: i32) -> (i32, i32, i32) {
    %c0_i32 = arith.constant 0 : i32
    %c0_i32_0 = arith.constant 0 : i32
    %c0_i32_1 = arith.constant 0 : i32
    return %arg0, %c0_i32, %c0_i32_0 : i32, i32, i32
  }
}

</mosaic_0001>

<llo_original>
// kernel: res_encoder.1
$region0: #{res_encoder.1}
  #allocation0 [shape = 'u32[]', space=smem, size = 0x4, offset = 0x4, fixed_abs, tag = 'smem constant byte address 0x4 - core index']
  #allocation1 [shape = 'u32[72,128]{1,0:T(1,128)}', space=vmem, size = 0x9000, scoped, tag = 'internal scratch']
  %s0 = inlined_call_operand.vmem [shape: f32[2,16,64], index: 0, kind: input, shape index: {}]
  %s1 = inlined_call_operand.vmem [shape: f32[192,256], index: 1, kind: input, shape index: {}]
  %s2 = inlined_call_operand.hbm [shape: f32[384,128], index: 2, kind: input, shape index: {}]
  %s3 = inlined_call_operand.vmem [shape: f32[1,256], index: 3, kind: input, shape index: {}]
  %s4 = inlined_call_operand.vmem [shape: f32[1,128], index: 4, kind: input, shape index: {}]
  %s5 = inlined_call_operand.vmem [shape: f32[2,16,128], index: 5, kind: output, shape index: {}]
  %s6 = sld [smem:[#allocation0]]
  $region57: #{res_encoder.1} parent=0
    _
  %s8 = ssub.s32 1, %s6
  %s9 = scalar_select 0, %s8, %s6
  $region1: #{res_encoder.1} parent=0
    #allocation2 [shape = 'u8[196608]{0}', space=vmem, size = 0x30000, scoped, tag = 'input window, operand 2, single buffered']
    #allocation3 [shape = 's32[2]{0}', space=sflag, size = 0x8, scoped, tag = 'scoped memory for res_encoder.1']
    %10 = vsyncpa [#allocation3], 0
    loop: start=0, step=1, limit=4
    $region2: #{res_encoder.1} parent=1 // loop_pre_header
      _
    $region3: #{res_encoder.1} parent=1 // loop_header
      %s12 = sphi 0, %s16
      %p13 = scmp.ge.s32.totalorder %s12, 4
      %s22 = sphi 0, %s24
      %s25 = sphi 0, %s22
      %s26 = sphi 0, %s25
      %s42 = sphi 0, %s26
      %s46 = sphi 0, %s46
      %s48 = sphi 0, %s46
      %s49 = sphi 0, %s48
      %s63 = sphi 0, %s49
      %s67 = sphi 0, %s67
      %s69 = sphi 0, %s67
      %s70 = sphi 0, %s69
      %s84 = sphi 0, %s70
      %s88 = sphi 0, %s88
      %s90 = sphi 0, %s88
      %s91 = sphi 0, %s90
      %s105 = sphi 0, %s91
      %s109 = sphi 0, %s109
      %s111 = sphi 0, %s109
      %s112 = sphi 0, %s111
      %s126 = sphi 0, %s112
      %s132 = sphi 0, %s134
      %s135 = sphi 0, %s132
      %s136 = sphi 0, %s135
      %s152 = sphi 0, %s136
    $region4: #{res_encoder.1} parent=1 // loop_header_branch
      %15 = sbr.rel (%p13) target = $region8
    $region5: #{res_encoder.1} parent=1 // loop_body
      %s17 = ssub.s32 %s12, 1
      %s18 = ssub.s32 %s12, 2
      %s19 = sadd.s32 %s12, 1
      %s20 = ssub.s32 %s12, %s19
      %p21 = scmp.eq.s32.totalorder %s20, 0
      %s23 = sadd.s32 %s22, 1
      %s24 = scalar_select %p21, %s22, %s23
      %p27 = pneg %p21
      %p28 = scmp.eq.s32.totalorder %s12, 1
      %p29 = por %p27, %p28
      %p30 = scmp.ne.s32.totalorder %s22, %s25
      %p31 = scmp.eq.s32.totalorder %s12, 0
      %p32 = por %p30, %p31
      %p33 = scmp.ne.s32.totalorder %s22, %s25
      %p34 = scmp.eq.s32.totalorder %s17, 1
      %p35 = por %p33, %p34
      %p36 = scmp.ne.s32.totalorder %s25, %s26
      %p37 = scmp.eq.s32.totalorder %s17, 0
      %p38 = por %p36, %p37
      %p39 = scmp.ne.s32.totalorder %s25, %s26
      %p40 = scmp.eq.s32.totalorder %s18, 1
      %p41 = por %p39, %p40
      %p43 = scmp.ne.s32.totalorder %s26, %s42
      %p44 = scmp.eq.s32.totalorder %s18, 0
      %p45 = por %p43, %p44
      %s47 = sadd.s32 %s46, 1
      %p50 = scmp.eq.s32.totalorder %s12, 1
      %p51 = scmp.ne.s32.totalorder %s46, %s48
      %p52 = scmp.eq.s32.totalorder %s12, 0
      %p53 = por %p51, %p52
      %p54 = scmp.ne.s32.totalorder %s46, %s48
      %p55 = scmp.eq.s32.totalorder %s17, 1
      %p56 = por %p54, %p55
      %p57 = scmp.ne.s32.totalorder %s48, %s49
      %p58 = scmp.eq.s32.totalorder %s17, 0
      %p59 = por %p57, %p58
      %p60 = scmp.ne.s32.totalorder %s48, %s49
      %p61 = scmp.eq.s32.totalorder %s18, 1
      %p62 = por %p60, %p61
      %p64 = scmp.ne.s32.totalorder %s49, %s63
      %p65 = scmp.eq.s32.totalorder %s18, 0
      %p66 = por %p64, %p65
      %s68 = sadd.s32 %s67, 1
      %p71 = scmp.eq.s32.totalorder %s12, 1
      %p72 = scmp.ne.s32.totalorder %s67, %s69
      %p73 = scmp.eq.s32.totalorder %s12, 0
      %p74 = por %p72, %p73
      %p75 = scmp.ne.s32.totalorder %s67, %s69
      %p76 = scmp.eq.s32.totalorder %s17, 1
      %p77 = por %p75, %p76
      %p78 = scmp.ne.s32.totalorder %s69, %s70
      %p79 = scmp.eq.s32.totalorder %s17, 0
      %p80 = por %p78, %p79
      %p81 = scmp.ne.s32.totalorder %s69, %s70
      %p82 = scmp.eq.s32.totalorder %s18, 1
      %p83 = por %p81, %p82
      %p85 = scmp.ne.s32.totalorder %s70, %s84
      %p86 = scmp.eq.s32.totalorder %s18, 0
      %p87 = por %p85, %p86
      %s89 = sadd.s32 %s88, 1
      %p92 = scmp.eq.s32.totalorder %s12, 1
      %p93 = scmp.ne.s32.totalorder %s88, %s90
      %p94 = scmp.eq.s32.totalorder %s12, 0
      %p95 = por %p93, %p94
      %p96 = scmp.ne.s32.totalorder %s88, %s90
      %p97 = scmp.eq.s32.totalorder %s17, 1
      %p98 = por %p96, %p97
      %p99 = scmp.ne.s32.totalorder %s90, %s91
      %p100 = scmp.eq.s32.totalorder %s17, 0
      %p101 = por %p99, %p100
      %p102 = scmp.ne.s32.totalorder %s90, %s91
      %p103 = scmp.eq.s32.totalorder %s18, 1
      %p104 = por %p102, %p103
      %p106 = scmp.ne.s32.totalorder %s91, %s105
      %p107 = scmp.eq.s32.totalorder %s18, 0
      %p108 = por %p106, %p107
      %s110 = sadd.s32 %s109, 1
      %p113 = scmp.eq.s32.totalorder %s12, 1
      %p114 = scmp.ne.s32.totalorder %s109, %s111
      %p115 = scmp.eq.s32.totalorder %s12, 0
      %p116 = por %p114, %p115
      %p117 = scmp.ne.s32.totalorder %s109, %s111
      %p118 = scmp.eq.s32.totalorder %s17, 1
      %p119 = por %p117, %p118
      %p120 = scmp.ne.s32.totalorder %s111, %s112
      %p121 = scmp.eq.s32.totalorder %s17, 0
      %p122 = por %p120, %p121
      %p123 = scmp.ne.s32.totalorder %s111, %s112
      %p124 = scmp.eq.s32.totalorder %s18, 1
      %p125 = por %p123, %p124
      %p127 = scmp.ne.s32.totalorder %s112, %s126
      %p128 = scmp.eq.s32.totalorder %s18, 0
      %p129 = por %p127, %p128
      %s130 = ssub.s32 %s12, %s19
      %p131 = scmp.eq.s32.totalorder %s130, 0
      %s133 = sadd.s32 %s132, 1
      %s134 = scalar_select %p131, %s132, %s133
      %p137 = pneg %p131
      %p138 = scmp.eq.s32.totalorder %s12, 1
      %p139 = por %p137, %p138
      %p140 = scmp.ne.s32.totalorder %s132, %s135
      %p141 = scmp.eq.s32.totalorder %s12, 0
      %p142 = por %p140, %p141
      %p143 = scmp.ne.s32.totalorder %s132, %s135
      %p144 = scmp.eq.s32.totalorder %s17, 1
      %p145 = por %p143, %p144
      %p146 = scmp.ne.s32.totalorder %s135, %s136
      %p147 = scmp.eq.s32.totalorder %s17, 0
      %p148 = por %p146, %p147
      %p149 = scmp.ne.s32.totalorder %s135, %s136
      %p150 = scmp.eq.s32.totalorder %s18, 1
      %p151 = por %p149, %p150
      %p153 = scmp.ne.s32.totalorder %s136, %s152
      %p154 = scmp.eq.s32.totalorder %s18, 0
      %p155 = por %p153, %p154
      %p156 = scmp.le.s32.totalorder 1, %s12
      %p157 = scmp.lt.s32.totalorder %s12, 3
      %p158 = pnand %p156, %p157
      %p159 = pneg %p158
      // Predicated region
      $region9: #{res_encoder.1} parent=5 // pred_check
        _
      $region10: #{res_encoder.1} parent=5 // pred_check_branch
        %161 = sbr.rel (%p158) target = $region12
      $region11: #{res_encoder.1} parent=5 // pred_region
        %s162 = ssub.s32 %s12, 1
        // Predicated region
        $region13: #{res_encoder.1} parent=11 // pred_check
          %p163 = pneg %p59
        $region14: #{res_encoder.1} parent=11 // pred_check_branch
          %165 = sbr.rel (%p163) target = $region16
        $region15: #{res_encoder.1} parent=11 // pred_region
          _
        $region16: #{res_encoder.1} parent=11 // pred_fallthru
          _
        // Predicated region
        $region17: #{res_encoder.1} parent=11 // pred_check
          %p166 = pneg %p80
        $region18: #{res_encoder.1} parent=11 // pred_check_branch
          %168 = sbr.rel (%p166) target = $region20
        $region19: #{res_encoder.1} parent=11 // pred_region
          %170 = vsyncadd [#allocation3], 0
          %s171 = sshll.u32 %s2, 4
          %s172 = int_to_ptr.hbm [resolvable:$true] %s171
          %s173 = sshll.u32 [#allocation2], 4
          %s174 = int_to_ptr.vmem [resolvable:$true] %s173
          %179 = dma.hbm_to_vmem [thread:$0]  %s172, 6144, %s174, [#allocation3], 128, 128, 8
        $region20: #{res_encoder.1} parent=11 // pred_fallthru
          _
        // Predicated region
        $region21: #{res_encoder.1} parent=11 // pred_check
          %p180 = pneg %p101
        $region22: #{res_encoder.1} parent=11 // pred_check_branch
          %182 = sbr.rel (%p180) target = $region24
        $region23: #{res_encoder.1} parent=11 // pred_region
          _
        $region24: #{res_encoder.1} parent=11 // pred_fallthru
          _
        // Predicated region
        $region25: #{res_encoder.1} parent=11 // pred_check
          %p183 = pneg %p122
        $region26: #{res_encoder.1} parent=11 // pred_check_branch
          %185 = sbr.rel (%p183) target = $region28
        $region27: #{res_encoder.1} parent=11 // pred_region
          _
        $region28: #{res_encoder.1} parent=11 // pred_fallthru
          _
      $region12: #{res_encoder.1} parent=5 // pred_fallthru
        _
      %p186 = scmp.lt.s32.totalorder %s12, 2
      // Predicated region
      $region29: #{res_encoder.1} parent=5 // pred_check
        %p187 = pneg %p186
      $region30: #{res_encoder.1} parent=5 // pred_check_branch
        %189 = sbr.rel (%p187) target = $region32
      $region31: #{res_encoder.1} parent=5 // pred_region
        // Predicated region
        $region33: #{res_encoder.1} parent=31 // pred_check
          %p190 = pneg %p32
        $region34: #{res_encoder.1} parent=31 // pred_check_branch
          %192 = sbr.rel (%p190) target = $region36
        $region35: #{res_encoder.1} parent=31 // pred_region
          %p193 = scmp.lt.s32.totalorder %s12, 1
          %s194 = scalar_select %p193, %s12, 1
          %s195 = smul.addr %s194, 2
          %s196 = smul.addr %s195, 8
          %s197 = scalar_lea.vmem %s0, %s196
        $region36: #{res_encoder.1} parent=31 // pred_fallthru
          _
      $region32: #{res_encoder.1} parent=5 // pred_fallthru
        _
      %p198 = scmp.le.s32.totalorder 1, %s12
      %p199 = scmp.lt.s32.totalorder %s12, 3
      %p200 = pnand %p198, %p199
      %p201 = pneg %p200
      // Predicated region
      $region37: #{res_encoder.1} parent=5 // pred_check
        _
      $region38: #{res_encoder.1} parent=5 // pred_check_branch
        %203 = sbr.rel (%p200) target = $region40
      $region39: #{res_encoder.1} parent=5 // pred_region
        %s204 = ssub.s32 %s12, 1
        // Predicated region
        $region41: #{res_encoder.1} parent=39 // pred_check
          %p205 = pneg %p80
        $region42: #{res_encoder.1} parent=39 // pred_check_branch
          %207 = sbr.rel (%p205) target = $region44
        $region43: #{res_encoder.1} parent=39 // pred_region
          %209 = dma.done [#allocation3], 6144
        $region44: #{res_encoder.1} parent=39 // pred_fallthru
          _
        %p210 = scmp.lt.s32.totalorder %s17, 1
        %s211 = scalar_select %p210, %s17, 1
        %s212 = smul.addr %s211, 2
        %s213 = smul.addr %s212, 8
        %s214 = scalar_lea.vmem %s0, %s213
        %p215 = pneg %p38
        %p216 = pneg %p35
        %p217 = pneg %p59
        %p218 = pneg %p56
        %p219 = pneg %p80
        %p220 = pneg %p77
        %p221 = pneg %p101
        %p222 = pneg %p98
        %p223 = pneg %p122
        %p224 = pneg %p119
        %p225 = pneg %p148
        %p226 = pneg %p145
        %p227 = scmp.lt.s32.totalorder %s17, 1
        %s228 = scalar_select %p227, %s17, 1
        %s229 = smul.addr %s228, 2
        %s230 = smul.addr %s229, 8
        %s231 = scalar_lea.vmem %s5, %s230
        %p232 = scmp.lt.s32.totalorder %s17, 1
        %s233 = scalar_select %p232, %s17, 1
        %s234 = smul.addr %s233, 2
        %s235 = smul.addr %s234, 8
        %s236 = scalar_lea.vmem %s0, %s235
        %p237 = scmp.lt.s32.totalorder %s17, 1
        %s238 = scalar_select %p237, %s17, 1
        %s239 = smul.addr %s238, 2
        %s240 = smul.addr %s239, 8
        %s241 = scalar_lea.vmem %s5, %s240
        %v242 = vld [vmem:[%s236] sm:$0xff]
        %v243 = vld [vmem:[%s236 + $0x8] sm:$0xff]
        %vm246 = vcmask 1040384
        %v247 = vrot.slane %v242, 7
        %v248 = vrot.slane %v243, 7
        %v249 = vsel %vm246, %v247, %v248
        %v252 = vsel %vm246, 0.0, %v247
        %vm253 = vcmask 1046528
        %v254 = vrot.slane %v242, 1
        %v255 = vrot.slane %v243, 1
        %v256 = vsel %vm253, %v254, %v255
        %v258 = vsel %vm253, %v255, 0.0
        %259 = vrot.lane.b32.xlu0 %v242, 64
        %v260 = vpop.permute.xlu0 %259
        %261 = vrot.lane.b32.xlu0 %v243, 64
        %v262 = vpop.permute.xlu0 %261
        %vm265 = vcmask 523264
        %v266 = vsel %vm265, %v252, %v260
        %v267 = vsel %vm265, %v249, %v262
        %v268 = vld [vmem:[%s1] sm:$0xff]
        %v269 = vld [vmem:[%s1 + $0x8] sm:$0xff]
        %v270 = vld [vmem:[%s1 + $0x10] sm:$0xff]
        %v271 = vld [vmem:[%s1 + $0x18] sm:$0xff]
        %v272 = vld [vmem:[%s1 + $0x20] sm:$0xff]
        %v273 = vld [vmem:[%s1 + $0x28] sm:$0xff]
        %v274 = vld [vmem:[%s1 + $0x30] sm:$0xff]
        %v275 = vld [vmem:[%s1 + $0x38] sm:$0xff]
        %v276 = vld [vmem:[%s1 + $0x40] sm:$0xff]
        %v277 = vld [vmem:[%s1 + $0x48] sm:$0xff]
        %v278 = vld [vmem:[%s1 + $0x50] sm:$0xff]
        %v279 = vld [vmem:[%s1 + $0x58] sm:$0xff]
        %v280 = vld [vmem:[%s1 + $0x60] sm:$0xff]
        %v281 = vld [vmem:[%s1 + $0x68] sm:$0xff]
        %v282 = vld [vmem:[%s1 + $0x70] sm:$0xff]
        %v283 = vld [vmem:[%s1 + $0x78] sm:$0xff]
        %v284 = vld [vmem:[%s1 + $0x80] sm:$0xff]
        %v285 = vld [vmem:[%s1 + $0x88] sm:$0xff]
        %v286 = vld [vmem:[%s1 + $0x90] sm:$0xff]
        %v287 = vld [vmem:[%s1 + $0x98] sm:$0xff]
        %v288 = vld [vmem:[%s1 + $0xa0] sm:$0xff]
        %v289 = vld [vmem:[%s1 + $0xa8] sm:$0xff]
        %v290 = vld [vmem:[%s1 + $0xb0] sm:$0xff]
        %v291 = vld [vmem:[%s1 + $0xb8] sm:$0xff]
        %v292 = vld [vmem:[%s1 + $0xc0] sm:$0xff]
        %v293 = vld [vmem:[%s1 + $0xc8] sm:$0xff]
        %v294 = vld [vmem:[%s1 + $0xd0] sm:$0xff]
        %v295 = vld [vmem:[%s1 + $0xd8] sm:$0xff]
        %v296 = vld [vmem:[%s1 + $0xe0] sm:$0xff]
        %v297 = vld [vmem:[%s1 + $0xe8] sm:$0xff]
        %v298 = vld [vmem:[%s1 + $0xf0] sm:$0xff]
        %v299 = vld [vmem:[%s1 + $0xf8] sm:$0xff]
        %v300 = vld [vmem:[%s1 + $0x100] sm:$0xff]
        %v301 = vld [vmem:[%s1 + $0x108] sm:$0xff]
        %v302 = vld [vmem:[%s1 + $0x110] sm:$0xff]
        %v303 = vld [vmem:[%s1 + $0x118] sm:$0xff]
        %v304 = vld [vmem:[%s1 + $0x120] sm:$0xff]
        %v305 = vld [vmem:[%s1 + $0x128] sm:$0xff]
        %v306 = vld [vmem:[%s1 + $0x130] sm:$0xff]
        %v307 = vld [vmem:[%s1 + $0x138] sm:$0xff]
        %v308 = vld [vmem:[%s1 + $0x140] sm:$0xff]
        %v309 = vld [vmem:[%s1 + $0x148] sm:$0xff]
        %v310 = vld [vmem:[%s1 + $0x150] sm:$0xff]
        %v311 = vld [vmem:[%s1 + $0x158] sm:$0xff]
        %v312 = vld [vmem:[%s1 + $0x160] sm:$0xff]
        %v313 = vld [vmem:[%s1 + $0x168] sm:$0xff]
        %v314 = vld [vmem:[%s1 + $0x170] sm:$0xff]
        %v315 = vld [vmem:[%s1 + $0x178] sm:$0xff]
        %v316 = vld [vmem:[%s3] sm:$0x3]
        %v318 = vperm.slane %v316, 0
        %v319 = vperm.slane %v316, 1
        %v322 = vsel %vm265, %v256, 0
        %v325 = vsel %vm265, %v258, 0
        %327 = vmatpush.msra.mxu0 %v298
        %328 = vmatpush.msra.mxu0 %v296
        %329 = vmatpush.msra.mxu0 %v294
        %330 = vmatpush.msra.mxu0 %v292
        %331 = vmatpush.msra.mxu0 %v290
        %332 = vmatpush.msra.mxu0 %v288
        %333 = vmatpush.msra.mxu0 %v286
        %334 = vmatpush.msra.mxu0 %v284
        %335 = vmatpush.msra.mxu0 %v282
        %336 = vmatpush.msra.mxu0 %v280
        %337 = vmatpush.msra.mxu0 %v278
        %338 = vmatpush.msra.mxu0 %v276
        %339 = vmatpush.msra.mxu0 %v274
        %340 = vmatpush.msra.mxu0 %v272
        %341 = vmatpush.msra.mxu0 %v270
        %342 = vmatpush.msra.mxu0 %v268
        %343 = vmatmul.f32.gmra.mxu0 %v266
        %v344 = vpop.f32.mrf.mxu0
        %v345 = vadd.f32 %v318, %v344
        %346 = vmatmul.f32.gmra.mxu0 %v267
        %v347 = vpop.f32.mrf.mxu0
        %v348 = vadd.f32 %v318, %v347
        %349 = vdwg.mxu0
        %350 = vmatpush.msra.mxu0 0.0
        %351 = vmatpush.msra.mxu0 0.0
        %352 = vmatpush.msra.mxu0 0.0
        %353 = vmatpush.msra.mxu0 0.0
        %354 = vmatpush.msra.mxu0 0.0
        %355 = vmatpush.msra.mxu0 0.0
        %356 = vmatpush.msra.mxu0 0.0
        %357 = vmatpush.msra.mxu0 0.0
        %358 = vmatpush.msra.mxu0 %v314
        %359 = vmatpush.msra.mxu0 %v312
        %360 = vmatpush.msra.mxu0 %v310
        %361 = vmatpush.msra.mxu0 %v308
        %362 = vmatpush.msra.mxu0 %v306
        %363 = vmatpush.msra.mxu0 %v304
        %364 = vmatpush.msra.mxu0 %v302
        %365 = vmatpush.msra.mxu0 %v300
        %366 = vmatmul.f32.gmra.mxu0 %v322
        %v367 = vpop.f32.mrf.mxu0
        %v368 = vadd.f32 %v345, %v367
        %369 = vmatmul.f32.gmra.mxu0 %v325
        %v370 = vpop.f32.mrf.mxu0
        %v371 = vadd.f32 %v348, %v370
        %372 = vdwg.mxu0
        %373 = vmatpush.msra.mxu0 %v299
        %374 = vmatpush.msra.mxu0 %v297
        %375 = vmatpush.msra.mxu0 %v295
        %376 = vmatpush.msra.mxu0 %v293
        %377 = vmatpush.msra.mxu0 %v291
        %378 = vmatpush.msra.mxu0 %v289
        %379 = vmatpush.msra.mxu0 %v287
        %380 = vmatpush.msra.mxu0 %v285
        %381 = vmatpush.msra.mxu0 %v283
        %382 = vmatpush.msra.mxu0 %v281
        %383 = vmatpush.msra.mxu0 %v279
        %384 = vmatpush.msra.mxu0 %v277
        %385 = vmatpush.msra.mxu0 %v275
        %386 = vmatpush.msra.mxu0 %v273
        %387 = vmatpush.msra.mxu0 %v271
        %388 = vmatpush.msra.mxu0 %v269
        %389 = vmatmul.f32.gmra.mxu0 %v266
        %v390 = vpop.f32.mrf.mxu0
        %v391 = vadd.f32 %v319, %v390
        %392 = vmatmul.f32.gmra.mxu0 %v267
        %v393 = vpop.f32.mrf.mxu0
        %v394 = vadd.f32 %v319, %v393
        %395 = vdwg.mxu0
        %396 = vmatpush.msra.mxu0 0.0
        %397 = vmatpush.msra.mxu0 0.0
        %398 = vmatpush.msra.mxu0 0.0
        %399 = vmatpush.msra.mxu0 0.0
        %400 = vmatpush.msra.mxu0 0.0
        %401 = vmatpush.msra.mxu0 0.0
        %402 = vmatpush.msra.mxu0 0.0
        %403 = vmatpush.msra.mxu0 0.0
        %404 = vmatpush.msra.mxu0 %v315
        %405 = vmatpush.msra.mxu0 %v313
        %406 = vmatpush.msra.mxu0 %v311
        %407 = vmatpush.msra.mxu0 %v309
        %408 = vmatpush.msra.mxu0 %v307
        %409 = vmatpush.msra.mxu0 %v305
        %410 = vmatpush.msra.mxu0 %v303
        %411 = vmatpush.msra.mxu0 %v301
        %412 = vmatmul.f32.gmra.mxu0 %v322
        %v413 = vpop.f32.mrf.mxu0
        %v414 = vadd.f32 %v391, %v413
        %415 = vmatmul.f32.gmra.mxu0 %v325
        %v416 = vpop.f32.mrf.mxu0
        %v417 = vadd.f32 %v394, %v416
        %418 = vdwg.mxu0
        %v419 = vmax.f32 %v368, 0.0
        %v420 = vmax.f32 %v371, 0.0
        %v423 = vrot.slane %v419, 7
        %v424 = vrot.slane %v420, 7
        %v425 = vsel %vm246, %v423, %v424
        %v428 = vsel %vm246, 0.0, %v423
        %v429 = vrot.slane %v419, 1
        %v430 = vrot.slane %v420, 1
        %v431 = vsel %vm253, %v429, %v430
        %v434 = vsel %vm253, %v430, 0.0
        %v435 = vld [vmem:[#allocation2] sm:$0xff]
        %v436 = vld [vmem:[#allocation2 + $0x8] sm:$0xff]
        %v437 = vld [vmem:[#allocation2 + $0x10] sm:$0xff]
        %v438 = vld [vmem:[#allocation2 + $0x18] sm:$0xff]
        %v439 = vld [vmem:[#allocation2 + $0x20] sm:$0xff]
        %v440 = vld [vmem:[#allocation2 + $0x28] sm:$0xff]
        %v441 = vld [vmem:[#allocation2 + $0x30] sm:$0xff]
        %v442 = vld [vmem:[#allocation2 + $0x38] sm:$0xff]
        %v443 = vld [vmem:[#allocation2 + $0x40] sm:$0xff]
        %v444 = vld [vmem:[#allocation2 + $0x48] sm:$0xff]
        %v445 = vld [vmem:[#allocation2 + $0x50] sm:$0xff]
        %v446 = vld [vmem:[#allocation2 + $0x58] sm:$0xff]
        %v447 = vld [vmem:[#allocation2 + $0x60] sm:$0xff]
        %v448 = vld [vmem:[#allocation2 + $0x68] sm:$0xff]
        %v449 = vld [vmem:[#allocation2 + $0x70] sm:$0xff]
        %v450 = vld [vmem:[#allocation2 + $0x78] sm:$0xff]
        %v451 = vld [vmem:[#allocation2 + $0x80] sm:$0xff]
        %v452 = vld [vmem:[#allocation2 + $0x88] sm:$0xff]
        %v453 = vld [vmem:[#allocation2 + $0x90] sm:$0xff]
        %v454 = vld [vmem:[#allocation2 + $0x98] sm:$0xff]
        %v455 = vld [vmem:[#allocation2 + $0xa0] sm:$0xff]
        %v456 = vld [vmem:[#allocation2 + $0xa8] sm:$0xff]
        %v457 = vld [vmem:[#allocation2 + $0xb0] sm:$0xff]
        %v458 = vld [vmem:[#allocation2 + $0xb8] sm:$0xff]
        %v459 = vld [vmem:[#allocation2 + $0xc0] sm:$0xff]
        %v460 = vld [vmem:[#allocation2 + $0xc8] sm:$0xff]
        %v461 = vld [vmem:[#allocation2 + $0xd0] sm:$0xff]
        %v462 = vld [vmem:[#allocation2 + $0xd8] sm:$0xff]
        %v463 = vld [vmem:[#allocation2 + $0xe0] sm:$0xff]
        %v464 = vld [vmem:[#allocation2 + $0xe8] sm:$0xff]
        %v465 = vld [vmem:[#allocation2 + $0xf0] sm:$0xff]
        %v466 = vld [vmem:[#allocation2 + $0xf8] sm:$0xff]
        %v467 = vld [vmem:[#allocation2 + $0x100] sm:$0xff]
        %v468 = vld [vmem:[#allocation2 + $0x108] sm:$0xff]
        %v469 = vld [vmem:[#allocation2 + $0x110] sm:$0xff]
        %v470 = vld [vmem:[#allocation2 + $0x118] sm:$0xff]
        %v471 = vld [vmem:[#allocation2 + $0x120] sm:$0xff]
        %v472 = vld [vmem:[#allocation2 + $0x128] sm:$0xff]
        %v473 = vld [vmem:[#allocation2 + $0x130] sm:$0xff]
        %v474 = vld [vmem:[#allocation2 + $0x138] sm:$0xff]
        %v475 = vld [vmem:[#allocation2 + $0x140] sm:$0xff]
        %v476 = vld [vmem:[#allocation2 + $0x148] sm:$0xff]
        %v477 = vld [vmem:[#allocation2 + $0x150] sm:$0xff]
        %v478 = vld [vmem:[#allocation2 + $0x158] sm:$0xff]
        %v479 = vld [vmem:[#allocation2 + $0x160] sm:$0xff]
        %v480 = vld [vmem:[#allocation2 + $0x168] sm:$0xff]
        %v481 = vld [vmem:[#allocation2 + $0x170] sm:$0xff]
        %v482 = vld [vmem:[#allocation2 + $0x178] sm:$0xff]
        %v483 = vld [vmem:[%s4] sm:$0x1]
        %v485 = vperm.slane %v483, 0
        %487 = vmatpush.msra.mxu0 %v450
        %488 = vmatpush.msra.mxu0 %v449
        %489 = vmatpush.msra.mxu0 %v448
        %490 = vmatpush.msra.mxu0 %v447
        %491 = vmatpush.msra.mxu0 %v446
        %492 = vmatpush.msra.mxu0 %v445
        %493 = vmatpush.msra.mxu0 %v444
        %494 = vmatpush.msra.mxu0 %v443
        %495 = vmatpush.msra.mxu0 %v442
        %496 = vmatpush.msra.mxu0 %v441
        %497 = vmatpush.msra.mxu0 %v440
        %498 = vmatpush.msra.mxu0 %v439
        %499 = vmatpush.msra.mxu0 %v438
        %500 = vmatpush.msra.mxu0 %v437
        %501 = vmatpush.msra.mxu0 %v436
        %502 = vmatpush.msra.mxu0 %v435
        %503 = vmatmul.f32.gmra.mxu0 %v428
        %v504 = vpop.f32.mrf.mxu0
        %v505 = vadd.f32 %v485, %v504
        %506 = vmatmul.f32.gmra.mxu0 %v425
        %v507 = vpop.f32.mrf.mxu0
        %v508 = vadd.f32 %v485, %v507
        %509 = vdwg.mxu0
        %510 = vmatpush.msra.mxu0 %v466
        %511 = vmatpush.msra.mxu0 %v465
        %512 = vmatpush.msra.mxu0 %v464
        %513 = vmatpush.msra.mxu0 %v463
        %514 = vmatpush.msra.mxu0 %v462
        %515 = vmatpush.msra.mxu0 %v461
        %516 = vmatpush.msra.mxu0 %v460
        %517 = vmatpush.msra.mxu0 %v459
        %518 = vmatpush.msra.mxu0 %v458
        %519 = vmatpush.msra.mxu0 %v457
        %520 = vmatpush.msra.mxu0 %v456
        %521 = vmatpush.msra.mxu0 %v455
        %522 = vmatpush.msra.mxu0 %v454
        %523 = vmatpush.msra.mxu0 %v453
        %524 = vmatpush.msra.mxu0 %v452
        %525 = vmatpush.msra.mxu0 %v451
        %526 = vmatmul.f32.gmra.mxu0 %v419
        %v527 = vpop.f32.mrf.mxu0
        %v528 = vadd.f32 %v505, %v527
        %529 = vmatmul.f32.gmra.mxu0 %v420
        %v530 = vpop.f32.mrf.mxu0
        %v531 = vadd.f32 %v508, %v530
        %532 = vdwg.mxu0
        %533 = vmatpush.msra.mxu0 %v482
        %534 = vmatpush.msra.mxu0 %v481
        %535 = vmatpush.msra.mxu0 %v480
        %536 = vmatpush.msra.mxu0 %v479
        %537 = vmatpush.msra.mxu0 %v478
        %538 = vmatpush.msra.mxu0 %v477
        %539 = vmatpush.msra.mxu0 %v476
        %540 = vmatpush.msra.mxu0 %v475
        %541 = vmatpush.msra.mxu0 %v474
        %542 = vmatpush.msra.mxu0 %v473
        %543 = vmatpush.msra.mxu0 %v472
        %544 = vmatpush.msra.mxu0 %v471
        %545 = vmatpush.msra.mxu0 %v470
        %546 = vmatpush.msra.mxu0 %v469
        %547 = vmatpush.msra.mxu0 %v468
        %548 = vmatpush.msra.mxu0 %v467
        %549 = vmatmul.f32.gmra.mxu0 %v431
        %v550 = vpop.f32.mrf.mxu0
        %v551 = vadd.f32 %v528, %v550
        %552 = vmatmul.f32.gmra.mxu0 %v434
        %v553 = vpop.f32.mrf.mxu0
        %v554 = vadd.f32 %v531, %v553
        %555 = vdwg.mxu0
        %v556 = vmax.f32 %v551, 0.0
        %v557 = vmax.f32 %v554, 0.0
        %v558 = vadd.f32 %v556, %v414
        %v559 = vadd.f32 %v557, %v417
        %v560 = vmax.f32 %v558, 0.0
        %v561 = vmax.f32 %v559, 0.0
        %562 = vst [vmem:[%s241] sm:$0xff] %v560
        %563 = vst [vmem:[%s241 + $0x8] sm:$0xff] %v561
        %p564 = scmp.lt.s32.totalorder %s17, 1
        %s565 = scalar_select %p564, %s17, 1
        %s566 = smul.addr %s565, 2
        %s567 = smul.addr %s566, 8
        %s568 = scalar_lea.vmem %s5, %s567
        // Predicated region
        $region45: #{res_encoder.1} parent=39 // pred_check
          %p569 = pneg %p145
        $region46: #{res_encoder.1} parent=39 // pred_check_branch
          %571 = sbr.rel (%p569) target = $region48
        $region47: #{res_encoder.1} parent=39 // pred_region
          _
        $region48: #{res_encoder.1} parent=39 // pred_fallthru
          _
      $region40: #{res_encoder.1} parent=5 // pred_fallthru
        _
      %p572 = scmp.le.s32.totalorder 2, %s12
      // Predicated region
      $region49: #{res_encoder.1} parent=5 // pred_check
        %p573 = pneg %p572
      $region50: #{res_encoder.1} parent=5 // pred_check_branch
        %575 = sbr.rel (%p573) target = $region52
      $region51: #{res_encoder.1} parent=5 // pred_region
        %s576 = ssub.s32 %s12, 2
        // Predicated region
        $region53: #{res_encoder.1} parent=51 // pred_check
          %p577 = pneg %p151
        $region54: #{res_encoder.1} parent=51 // pred_check_branch
          %579 = sbr.rel (%p577) target = $region56
        $region55: #{res_encoder.1} parent=51 // pred_region
          %p580 = scmp.lt.s32.totalorder %s18, 1
          %s581 = scalar_select %p580, %s18, 1
          %s582 = smul.addr %s581, 2
          %s583 = smul.addr %s582, 8
          %s584 = scalar_lea.vmem %s5, %s583
        $region56: #{res_encoder.1} parent=51 // pred_fallthru
          _
      $region52: #{res_encoder.1} parent=5 // pred_fallthru
        _
    $region6: #{res_encoder.1} parent=1 // loop_footer
      %s16 = sadd.s32 1, %s12
    $region7: #{res_encoder.1} parent=1 // loop_footer_branch
      %11 = sbr.rel target = $region3
    $region8: #{res_encoder.1} parent=1 // loop_exit
      _
    %585 = vsyncpa [#allocation3], 1
    %s586 = scalar_lea.sflag [#allocation3], 1
    %587 = vsyncpa %s586, 1

</llo_original>
